<compile_context>
chip_gen: v7x
topology: tpu7x:2x2x1
jax: 0.10.0
libtpu: 0.0.40
codegen_flags: <defaults>
</compile_context>

<pallas_src>
import jax
import jax.numpy as jnp
from jax.experimental import pallas as pl
from jax.experimental.pallas import tpu as pltpu


# ---------------------------------------------------------------------------
# Small helpers
# ---------------------------------------------------------------------------
def _cdiv(a, b):
    return -(-a // b)


def _round_up(x, m):
    return _cdiv(x, m) * m


# ---------------------------------------------------------------------------
# Kernels
# ---------------------------------------------------------------------------
def _mm_relu_single_k_kernel(a_ref, b_ref, o_ref):
    """K fits in one tile: branch-free fused matmul + ReLU."""
    o_ref[...] = jnp.maximum(
        jnp.dot(a_ref[...], b_ref[...], preferred_element_type=jnp.float32),
        0.0,
    ).astype(o_ref.dtype)


def _mm_relu_f32_out_kernel(a_ref, b_ref, o_ref):
    """Multi-step K, f32 output: accumulate directly into the resident output tile."""
    k = pl.program_id(2)

    @pl.when(k == 0)
    def _():
        o_ref[...] = jnp.zeros_like(o_ref)

    o_ref[...] += jnp.dot(a_ref[...], b_ref[...], preferred_element_type=jnp.float32)

    @pl.when(k == pl.num_programs(2) - 1)
    def _():
        o_ref[...] = jnp.maximum(o_ref[...], 0.0)


def _mm_relu_scratch_kernel(a_ref, b_ref, o_ref, acc_ref):
    """Multi-step K, narrow output dtype: f32 scratch accumulator, cast at the end."""
    k = pl.program_id(2)

    @pl.when(k == 0)
    def _():
        acc_ref[...] = jnp.zeros_like(acc_ref)

    acc_ref[...] += jnp.dot(a_ref[...], b_ref[...], preferred_element_type=jnp.float32)

    @pl.when(k == pl.num_programs(2) - 1)
    def _():
        o_ref[...] = jnp.maximum(acc_ref[...], 0.0).astype(o_ref.dtype)


# ---------------------------------------------------------------------------
# Tile selection
# ---------------------------------------------------------------------------
def _pick_tiles(M, N, K, in_bytes, out_bytes, vmem_budget, bf16_inputs):
    """Near-even tile splits, capped large, shrunk to fit the VMEM budget."""
    tm_cap = 1024 if bf16_inputs else 512
    tn_cap = 2048 if bf16_inputs else 1024
    tk_cap = 4096 if bf16_inputs else 2048

    def pick(dim, cap, mult):
        # Split `dim` into the fewest blocks <= cap, with the block a multiple
        # of `mult` (minimizes padding on non-divisible dims).
        dim_p = _round_up(dim, mult)
        nblk = _cdiv(dim_p, cap)
        return min(_round_up(_cdiv(dim_p, nblk), mult), _round_up(cap, mult))

    def working_set(tm, tn, tk):
        # double-buffered input tiles + double-buffered output tile + f32 scratch.
        return (2 * (tm * tk + tk * tn) * in_bytes
                + 2 * tm * tn * out_bytes
                + tm * tn * 4)

    tm = pick(M, tm_cap, 8)
    tn = pick(N, tn_cap, 128)
    tk = pick(K, tk_cap, 128)

    # Shrink to fit the scoped-VMEM budget. Shrink K depth first (it does not
    # change output-stationary arithmetic intensity), then N, then M.
    for _ in range(64):
        if working_set(tm, tn, tk) <= vmem_budget:
            break
        if tk > 512:
            tk_cap = max(tk_cap // 2, 512)
            tk = pick(K, tk_cap, 128)
        elif tn > 256:
            tn_cap = max(tn_cap // 2, 256)
            tn = pick(N, tn_cap, 128)
        elif tm > 128:
            tm_cap = max(tm_cap // 2, 128)
            tm = pick(M, tm_cap, 8)
        elif tk > 128:
            tk_cap = max(tk_cap // 2, 128)
            tk = pick(K, tk_cap, 128)
        elif tn > 128:
            tn_cap = max(tn_cap // 2, 128)
            tn = pick(N, tn_cap, 128)
        elif tm > 8:
            tm_cap = max(tm_cap // 2, 8)
            tm = pick(M, tm_cap, 8)
        else:
            break

    # Megacore: only shrink tm when there would otherwise be a single parallel
    # (i, j) block and the shape is big enough that the split is worthwhile
    # (v7x has 2 TensorCores sharing the grid's "parallel" axes).
    if _cdiv(M, tm) * _cdiv(N, tn) == 1 and _round_up(M, 8) >= 512:
        tm = _round_up(_cdiv(_round_up(M, 8), 2), 8)

    return tm, tn, tk


# ---------------------------------------------------------------------------
# Wrapper
# ---------------------------------------------------------------------------
def mm_relu(batch1, batch2, *, tm=None, tn=None, tk=None, use_bf16_inputs=False):
    assert batch1.ndim == 2 and batch2.ndim == 2
    M, K = batch1.shape
    K2, N = batch2.shape
    assert K == K2, "inner dimensions must match"
    out_dtype = batch1.dtype

    if use_bf16_inputs:
        # Opt-in precision mode: bf16 inputs, f32 MXU accumulation.  This
        # truncates inputs before the MXU and changes numerics vs. f32 torch.mm.
        batch1 = batch1.astype(jnp.bfloat16)
        batch2 = batch2.astype(jnp.bfloat16)

    in_bytes = jnp.dtype(batch1.dtype).itemsize
    out_bytes = jnp.dtype(out_dtype).itemsize

    # Generation-aware VMEM budget (v5e/v6e: 128 MiB, v7x: 64 MiB per TC).
    try:
        vmem_cap = int(pltpu.get_tpu_info().vmem_capacity_bytes)
    except Exception:
        vmem_cap = 64 << 20  # conservative fallback (v7x)
    vmem_budget = (vmem_cap * 3) // 4  # ~96 MiB on v5e/v6e, ~48 MiB on v7x

    if tm is None or tn is None or tk is None:
        atm, atn, atk = _pick_tiles(
            M, N, K, in_bytes, out_bytes, vmem_budget,
            bf16_inputs=(batch1.dtype == jnp.bfloat16))
        tm = atm if tm is None else tm
        tn = atn if tn is None else tn
        tk = atk if tk is None else tk
    assert tm % 8 == 0 and tn % 128 == 0 and tk % 128 == 0

    # Zero-pad to tile multiples in the wrapper: exact for matmul (zeros in K
    # contribute nothing), padded M/N rows/cols are sliced off.  Keeps every
    # block (8,128)-aligned and the output store lane-dense.
    gm, gn, gk = _cdiv(M, tm), _cdiv(N, tn), _cdiv(K, tk)
    Mp, Np, Kp = gm * tm, gn * tn, gk * tk
    if (Mp, Kp) != (M, K):
        batch1 = jnp.pad(batch1, ((0, Mp - M), (0, Kp - K)))
    if (Kp, Np) != (K, N):
        batch2 = jnp.pad(batch2, ((0, Kp - K), (0, Np - N)))

    single_k = gk == 1
    f32_out = out_dtype == jnp.float32

    scratch_shapes = []
    if single_k:
        kernel = _mm_relu_single_k_kernel
        grid = (gm, gn)
        in_specs = [
            pl.BlockSpec((tm, tk), lambda i, j: (i, 0)),
            pl.BlockSpec((tk, tn), lambda i, j: (0, j)),
        ]
        out_specs = pl.BlockSpec((tm, tn), lambda i, j: (i, j))
        dim_sem = ("parallel", "parallel")
    else:
        grid = (gm, gn, gk)
        in_specs = [
            pl.BlockSpec((tm, tk), lambda i, j, k: (i, k)),
            pl.BlockSpec((tk, tn), lambda i, j, k: (k, j)),
        ]
        out_specs = pl.BlockSpec((tm, tn), lambda i, j, k: (i, j))
        dim_sem = ("parallel", "parallel", "arbitrary")
        if f32_out:
            kernel = _mm_relu_f32_out_kernel
        else:
            kernel = _mm_relu_scratch_kernel
            scratch_shapes = [pltpu.VMEM((tm, tn), jnp.float32)]

    vmem_needed = (2 * (tm * tk + tk * tn) * in_bytes
                   + 2 * tm * tn * out_bytes
                   + (tm * tn * 4 if scratch_shapes else 0))
    vmem_limit = int(min(max(vmem_needed + (8 << 20), 32 << 20),
                         vmem_cap - (8 << 20)))

    cost = pl.CostEstimate(
        flops=2 * M * N * K,
        bytes_accessed=(M * K + K * N) * in_bytes + M * N * out_bytes,
        transcendentals=0,
    )

    out = pl.pallas_call(
        kernel,
        out_shape=jax.ShapeDtypeStruct((Mp, Np), out_dtype),
        grid_spec=pltpu.PrefetchScalarGridSpec(
            num_scalar_prefetch=0,
            grid=grid,
            in_specs=in_specs,
            out_specs=out_specs,
            scratch_shapes=scratch_shapes,
        ),
        compiler_params=pltpu.CompilerParams(
            dimension_semantics=dim_sem,
            vmem_limit_bytes=vmem_limit,
        ),
        cost_estimate=cost,
    )(batch1, batch2)

    if (Mp, Np) != (M, N):
        out = out[:M, :N]
    return out


if __name__ == "__main__":
    key = jax.random.PRNGKey(0)
    k1, k2, k3, k4, k5, k6, k7, k8 = jax.random.split(key, 8)

    # 1) Small demo shape (single-K, branch-free kernel path).
    M, K, N = 128, 256, 128
    a = jax.random.normal(k1, (M, K), dtype=jnp.float32)
    b = jax.random.normal(k2, (K, N), dtype=jnp.float32)
    out = jax.block_until_ready(mm_relu(a, b))
    ref = jnp.maximum(a @ b, 0.0)
    assert out.shape == (M, N)
    assert jnp.allclose(out, ref, atol=1e-4, rtol=1e-4)

    # 2) Larger shape: with the raised tk cap this is now a single K tile.
    M2, K2_, N2 = 256, 2048, 512
    a2 = jax.random.normal(k3, (M2, K2_), dtype=jnp.float32)
    b2 = jax.random.normal(k4, (K2_, N2), dtype=jnp.float32)
    out2 = jax.block_until_ready(mm_relu(a2, b2))
    ref2 = jnp.maximum(a2 @ b2, 0.0)
    assert out2.shape == (M2, N2)
    assert jnp.allclose(out2, ref2, atol=1e-3, rtol=1e-3)

    # 3) Same shape, forced multi-K-step f32 accumulation path.
    out3 = jax.block_until_ready(mm_relu(a2, b2, tk=512))
    assert jnp.allclose(out3, ref2, atol=1e-3, rtol=1e-3)

    # 4) Non-divisible dims: exercises the padding / lane-dense-store path.
    M4, K4, N4 = 200, 200, 200
    a4 = jax.random.normal(k5, (M4, K4), dtype=jnp.float32)
    b4 = jax.random.normal(k6, (K4, N4), dtype=jnp.float32)
    out4 = jax.block_until_ready(mm_relu(a4, b4))
    ref4 = jnp.maximum(a4 @ b4, 0.0)
    assert out4.shape == (M4, N4)
    assert jnp.allclose(out4, ref4, atol=1e-4, rtol=1e-4)

    # 5) bf16 inputs/outputs, forced multi-K (f32-scratch accumulator path).
    a5 = jax.random.normal(k7, (64, 256), dtype=jnp.bfloat16)
    b5 = jax.random.normal(k8, (256, 128), dtype=jnp.bfloat16)
    out5 = jax.block_until_ready(mm_relu(a5, b5, tk=128))
    ref5 = jnp.maximum(
        jnp.dot(a5, b5, preferred_element_type=jnp.float32), 0.0)
    assert out5.shape == (64, 128)
    assert jnp.allclose(out5.astype(jnp.float32), ref5, atol=2e-2, rtol=2e-2)

    print("KERNEL_OK")
</pallas_src>

<mosaic_0001>
module attributes {stable_mosaic.version = 11 : i64} {
  func.func @_mm_relu_single_k_kernel(%arg0: i32, %arg1: i32, %arg2: memref<128x256xf32, #tpu.memory_space<vmem>>, %arg3: memref<256x128xf32, #tpu.memory_space<vmem>>, %arg4: memref<128x128xf32, #tpu.memory_space<vmem>>) attributes {dimension_semantics = [#tpu.dimension_semantics<parallel>, #tpu.dimension_semantics<parallel>], iteration_bounds = array<i64: 1, 1>, scalar_prefetch = 0 : i64, scratch_operands = 0 : i64, tpu.core_type = #tpu.core_type<tc>, window_params = [{transform_indices = @transform_0, window_bounds = array<i64: 128, 256>}, {transform_indices = @transform_1, window_bounds = array<i64: 256, 128>}, {transform_indices = @transform_2, window_bounds = array<i64: 128, 128>}]} {
    %c0 = arith.constant 0 : index
    %c0_0 = arith.constant 0 : index
    %0 = vector.load %arg2[%c0, %c0_0] : memref<128x256xf32, #tpu.memory_space<vmem>>, vector<128x256xf32>
    %c0_1 = arith.constant 0 : index
    %c0_2 = arith.constant 0 : index
    %1 = vector.load %arg3[%c0_1, %c0_2] : memref<256x128xf32, #tpu.memory_space<vmem>>, vector<256x128xf32>
    %cst = arith.constant dense<0.000000e+00> : vector<128x128xf32>
    %2 = tpu.matmul %0, %1, %cst {dimension_numbers = #tpu.dot_dimension_numbers<[1], [0], [0], [1], [0, 0, 1, 1], [], []>} : vector<128x256xf32>, vector<256x128xf32>, vector<128x128xf32> -> vector<128x128xf32>
    %cst_3 = arith.constant 0.000000e+00 : f32
    %3 = vector.broadcast %cst_3 : f32 to vector<128x128xf32>
    %4 = arith.maximumf %2, %3 : vector<128x128xf32>
    %c0_4 = arith.constant 0 : index
    %c0_5 = arith.constant 0 : index
    %5 = vector.load %arg4[%c0_4, %c0_5] : memref<128x128xf32, #tpu.memory_space<vmem>>, vector<128x128xf32>
    tpu.vector_store %arg4[%c0_4, %c0_5], %4 {strides = array<i32>} : memref<128x128xf32, #tpu.memory_space<vmem>>, vector<128x128xf32>,
    return
  }
  func.func @transform_0(%arg0: i32, %arg1: i32) -> (i32, i32) {
    %c0_i32 = arith.constant 0 : i32
    %c0_i32_0 = arith.constant 0 : i32
    return %arg0, %c0_i32 : i32, i32
  }
  func.func @transform_1(%arg0: i32, %arg1: i32) -> (i32, i32) {
    %c0_i32 = arith.constant 0 : i32
    %c0_i32_0 = arith.constant 0 : i32
    return %c0_i32, %arg1 : i32, i32
  }
  func.func @transform_2(%arg0: i32, %arg1: i32) -> (i32, i32) {
    %c0_i32 = arith.constant 0 : i32
    return %arg0, %arg1 : i32, i32
  }
}

</mosaic_0001>

<llo_original>
// kernel: tpu_custom_call.1
$region0: #{tpu_custom_call.1}
  #allocation0 [shape = 'u32[]', space=smem, size = 0x4, offset = 0x4, fixed_abs, tag = 'smem constant byte address 0x4 - core index']
  #allocation1 [shape = 'u32[144,128]{1,0:T(1,128)}', space=vmem, size = 0x12000, scoped, tag = 'internal scratch']
  %s0 = inlined_call_operand.hbm [shape: f32[128,256], index: 0, kind: input, shape index: {}]
  %s1 = inlined_call_operand.hbm [shape: f32[256,128], index: 1, kind: input, shape index: {}]
  %s2 = inlined_call_operand.hbm [shape: f32[128,128], index: 2, kind: output, shape index: {}]
  %s3 = sld [smem:[#allocation0]]
  $region26: #{tpu_custom_call.1} parent=0
    _
  %s5 = ssub.s32 1, %s3
  %s6 = scalar_select 0, %s5, %s3
  $region1: #{tpu_custom_call.1} parent=0
    #allocation2 [shape = 'u8[131072]{0}', space=vmem, size = 0x20000, scoped, tag = 'input window, operand 0, single buffered']
    #allocation3 [shape = 's32[1]{0}', space=sflag, size = 0x4, scoped, tag = 'scoped memory for tpu_custom_call.1']
    #allocation4 [shape = 's32[1]{0}', space=sflag, size = 0x4, scoped, tag = 'scoped memory for tpu_custom_call.1']
    #allocation5 [shape = 'u8[131072]{0}', space=vmem, size = 0x20000, scoped, tag = 'input window, operand 1, single buffered']
    #allocation6 [shape = 's32[1]{0}', space=sflag, size = 0x4, scoped, tag = 'scoped memory for tpu_custom_call.1']
    #allocation7 [shape = 'u8[65536]{0}', space=vmem, size = 0x10000, scoped, tag = 'output window, operand 0, single buffered']
    %7 = vsyncpa [#allocation3], 0
    %8 = vsyncpa [#allocation6], 0
    %9 = vsyncpa [#allocation4], 0
    // Predicated region
    $region2: #{tpu_custom_call.1} parent=1 // pred_check
      _
    $region3: #{tpu_custom_call.1} parent=1 // pred_check_branch
      %11 = sbr.rel (0) target = $region5
    $region4: #{tpu_custom_call.1} parent=1 // pred_region
      %s13 = ssub.s32 4096, 4096
      %14 = vsyncadd [#allocation3], %s13
      %s15 = sshll.u32 [#allocation2], 4
      %s16 = int_to_ptr.vmem [resolvable:$true] %s15
      %21 = dma.hbm_to_vmem [thread:$0]  %s0, 4096, %s16, [#allocation3], 256, 256, 16
    $region5: #{tpu_custom_call.1} parent=1 // pred_fallthru
      _
    // Predicated region
    $region6: #{tpu_custom_call.1} parent=1 // pred_check
      _
    $region7: #{tpu_custom_call.1} parent=1 // pred_check_branch
      %23 = sbr.rel (0) target = $region9
    $region8: #{tpu_custom_call.1} parent=1 // pred_region
      %s25 = ssub.s32 4096, 4096
      %26 = vsyncadd [#allocation6], %s25
      %s27 = sshll.u32 [#allocation5], 4
      %s28 = int_to_ptr.vmem [resolvable:$true] %s27
      %33 = dma.hbm_to_vmem [thread:$0]  %s1, 4096, %s28, [#allocation6], 128, 128, 8
    $region9: #{tpu_custom_call.1} parent=1 // pred_fallthru
      _
    // Predicated region
    $region10: #{tpu_custom_call.1} parent=1 // pred_check
      _
    $region11: #{tpu_custom_call.1} parent=1 // pred_check_branch
      %35 = sbr.rel (0) target = $region13
    $region12: #{tpu_custom_call.1} parent=1 // pred_region
      %36 = dma.done [#allocation3], 4096
    $region13: #{tpu_custom_call.1} parent=1 // pred_fallthru
      _
    // Predicated region
    $region14: #{tpu_custom_call.1} parent=1 // pred_check
      _
    $region15: #{tpu_custom_call.1} parent=1 // pred_check_branch
      %38 = sbr.rel (0) target = $region17
    $region16: #{tpu_custom_call.1} parent=1 // pred_region
      %39 = dma.done [#allocation6], 4096
    $region17: #{tpu_custom_call.1} parent=1 // pred_fallthru
      _
    %v40 = vld [vmem:[#allocation2] sm:$0xff]
    %v41 = vld [vmem:[#allocation2 + $0x8] sm:$0xff]
    %v42 = vld [vmem:[#allocation2 + $0x10] sm:$0xff]
    %v43 = vld [vmem:[#allocation2 + $0x18] sm:$0xff]
    %v44 = vld [vmem:[#allocation2 + $0x20] sm:$0xff]
    %v45 = vld [vmem:[#allocation2 + $0x28] sm:$0xff]
    %v46 = vld [vmem:[#allocation2 + $0x30] sm:$0xff]
    %v47 = vld [vmem:[#allocation2 + $0x38] sm:$0xff]
    %v48 = vld [vmem:[#allocation2 + $0x40] sm:$0xff]
    %v49 = vld [vmem:[#allocation2 + $0x48] sm:$0xff]
    %v50 = vld [vmem:[#allocation2 + $0x50] sm:$0xff]
    %v51 = vld [vmem:[#allocation2 + $0x58] sm:$0xff]
    %v52 = vld [vmem:[#allocation2 + $0x60] sm:$0xff]
    %v53 = vld [vmem:[#allocation2 + $0x68] sm:$0xff]
    %v54 = vld [vmem:[#allocation2 + $0x70] sm:$0xff]
    %v55 = vld [vmem:[#allocation2 + $0x78] sm:$0xff]
    %v56 = vld [vmem:[#allocation2 + $0x80] sm:$0xff]
    %v57 = vld [vmem:[#allocation2 + $0x88] sm:$0xff]
    %v58 = vld [vmem:[#allocation2 + $0x90] sm:$0xff]
    %v59 = vld [vmem:[#allocation2 + $0x98] sm:$0xff]
    %v60 = vld [vmem:[#allocation2 + $0xa0] sm:$0xff]
    %v61 = vld [vmem:[#allocation2 + $0xa8] sm:$0xff]
    %v62 = vld [vmem:[#allocation2 + $0xb0] sm:$0xff]
    %v63 = vld [vmem:[#allocation2 + $0xb8] sm:$0xff]
    %v64 = vld [vmem:[#allocation2 + $0xc0] sm:$0xff]
    %v65 = vld [vmem:[#allocation2 + $0xc8] sm:$0xff]
    %v66 = vld [vmem:[#allocation2 + $0xd0] sm:$0xff]
    %v67 = vld [vmem:[#allocation2 + $0xd8] sm:$0xff]
    %v68 = vld [vmem:[#allocation2 + $0xe0] sm:$0xff]
    %v69 = vld [vmem:[#allocation2 + $0xe8] sm:$0xff]
    %v70 = vld [vmem:[#allocation2 + $0xf0] sm:$0xff]
    %v71 = vld [vmem:[#allocation2 + $0xf8] sm:$0xff]
    %v72 = vld [vmem:[#allocation5] sm:$0xff]
    %v73 = vld [vmem:[#allocation5 + $0x8] sm:$0xff]
    %v74 = vld [vmem:[#allocation5 + $0x10] sm:$0xff]
    %v75 = vld [vmem:[#allocation5 + $0x18] sm:$0xff]
    %v76 = vld [vmem:[#allocation5 + $0x20] sm:$0xff]
    %v77 = vld [vmem:[#allocation5 + $0x28] sm:$0xff]
    %v78 = vld [vmem:[#allocation5 + $0x30] sm:$0xff]
    %v79 = vld [vmem:[#allocation5 + $0x38] sm:$0xff]
    %v80 = vld [vmem:[#allocation5 + $0x40] sm:$0xff]
    %v81 = vld [vmem:[#allocation5 + $0x48] sm:$0xff]
    %v82 = vld [vmem:[#allocation5 + $0x50] sm:$0xff]
    %v83 = vld [vmem:[#allocation5 + $0x58] sm:$0xff]
    %v84 = vld [vmem:[#allocation5 + $0x60] sm:$0xff]
    %v85 = vld [vmem:[#allocation5 + $0x68] sm:$0xff]
    %v86 = vld [vmem:[#allocation5 + $0x70] sm:$0xff]
    %v87 = vld [vmem:[#allocation5 + $0x78] sm:$0xff]
    %v88 = vld [vmem:[#allocation5 + $0x80] sm:$0xff]
    %v89 = vld [vmem:[#allocation5 + $0x88] sm:$0xff]
    %v90 = vld [vmem:[#allocation5 + $0x90] sm:$0xff]
    %v91 = vld [vmem:[#allocation5 + $0x98] sm:$0xff]
    %v92 = vld [vmem:[#allocation5 + $0xa0] sm:$0xff]
    %v93 = vld [vmem:[#allocation5 + $0xa8] sm:$0xff]
    %v94 = vld [vmem:[#allocation5 + $0xb0] sm:$0xff]
    %v95 = vld [vmem:[#allocation5 + $0xb8] sm:$0xff]
    %v96 = vld [vmem:[#allocation5 + $0xc0] sm:$0xff]
    %v97 = vld [vmem:[#allocation5 + $0xc8] sm:$0xff]
    %v98 = vld [vmem:[#allocation5 + $0xd0] sm:$0xff]
    %v99 = vld [vmem:[#allocation5 + $0xd8] sm:$0xff]
    %v100 = vld [vmem:[#allocation5 + $0xe0] sm:$0xff]
    %v101 = vld [vmem:[#allocation5 + $0xe8] sm:$0xff]
    %v102 = vld [vmem:[#allocation5 + $0xf0] sm:$0xff]
    %v103 = vld [vmem:[#allocation5 + $0xf8] sm:$0xff]
    %104 = vmatprep.subr.mxu0 0.0
    %105 = vmatpush1.msra.mxu0 %v72
    %106 = vmatprep.subr.mxu0 0.0
    %107 = vmatpush1.msra.mxu0 %v73
    %108 = vmatprep.subr.mxu0 0.0
    %109 = vmatpush1.msra.mxu0 %v74
    %110 = vmatprep.subr.mxu0 0.0
    %111 = vmatpush1.msra.mxu0 %v75
    %112 = vmatprep.subr.mxu0 0.0
    %113 = vmatpush1.msra.mxu0 %v76
    %114 = vmatprep.subr.mxu0 0.0
    %115 = vmatpush1.msra.mxu0 %v77
    %116 = vmatprep.subr.mxu0 0.0
    %117 = vmatpush1.msra.mxu0 %v78
    %118 = vmatprep.subr.mxu0 0.0
    %119 = vmatpush1.msra.mxu0 %v79
    %120 = vmatprep.subr.mxu0 0.0
    %121 = vmatpush1.msra.mxu0 %v80
    %122 = vmatprep.subr.mxu0 0.0
    %123 = vmatpush1.msra.mxu0 %v81
    %124 = vmatprep.subr.mxu0 0.0
    %125 = vmatpush1.msra.mxu0 %v82
    %126 = vmatprep.subr.mxu0 0.0
    %127 = vmatpush1.msra.mxu0 %v83
    %128 = vmatprep.subr.mxu0 0.0
    %129 = vmatpush1.msra.mxu0 %v84
    %130 = vmatprep.subr.mxu0 0.0
    %131 = vmatpush1.msra.mxu0 %v85
    %132 = vmatprep.subr.mxu0 0.0
    %133 = vmatpush1.msra.mxu0 %v86
    %134 = vmatprep.subr.mxu0 0.0
    %135 = vmatpush1.msra.mxu0 %v87
    %136 = vmatprep.subr.mxu0 0.0
    %137 = vmatpush1.msra.mxu0 %v88
    %138 = vmatprep.subr.mxu0 0.0
    %139 = vmatpush1.msra.mxu0 %v89
    %140 = vmatprep.subr.mxu0 0.0
    %141 = vmatpush1.msra.mxu0 %v90
    %142 = vmatprep.subr.mxu0 0.0
    %143 = vmatpush1.msra.mxu0 %v91
    %144 = vmatprep.subr.mxu0 0.0
    %145 = vmatpush1.msra.mxu0 %v92
    %146 = vmatprep.subr.mxu0 0.0
    %147 = vmatpush1.msra.mxu0 %v93
    %148 = vmatprep.subr.mxu0 0.0
    %149 = vmatpush1.msra.mxu0 %v94
    %150 = vmatprep.subr.mxu0 0.0
    %151 = vmatpush1.msra.mxu0 %v95
    %152 = vmatprep.subr.mxu0 0.0
    %153 = vmatpush1.msra.mxu0 %v96
    %154 = vmatprep.subr.mxu0 0.0
    %155 = vmatpush1.msra.mxu0 %v97
    %156 = vmatprep.subr.mxu0 0.0
    %157 = vmatpush1.msra.mxu0 %v98
    %158 = vmatprep.subr.mxu0 0.0
    %159 = vmatpush1.msra.mxu0 %v99
    %160 = vmatprep.subr.mxu0 0.0
    %161 = vmatpush1.msra.mxu0 %v100
    %162 = vmatprep.subr.mxu0 0.0
    %163 = vmatpush1.msra.mxu0 %v101
    %164 = vmatprep.subr.mxu0 0.0
    %165 = vmatpush1.msra.mxu0 %v102
    %166 = vmatprep.subr.mxu0 0.0
    %167 = vmatpush1.msra.mxu0 %v103
    %168 = vmatprep.mubr.f32.mxu0 %v41
    %169 = vmatmul.mubr.f32.gmra.mrb[0].mxu0 %v40
    %v170 = vpop.f32.mrb[0].mxu0
    %v171 = vadd.f32 0.0, %v170
    %v172 = vpop.f32.mrb[0].mxu0
    %173 = vmatprep.mubr.f32.mxu0 %v43
    %174 = vmatmul.mubr.f32.gmra.mrb[0].mxu0 %v42
    %v175 = vpop.f32.mrb[0].mxu0
    %v176 = vadd.f32 0.0, %v175
    %v177 = vpop.f32.mrb[0].mxu0
    %178 = vmatprep.mubr.f32.mxu0 %v45
    %179 = vmatmul.mubr.f32.gmra.mrb[0].mxu0 %v44
    %v180 = vpop.f32.mrb[0].mxu0
    %v181 = vadd.f32 0.0, %v180
    %v182 = vpop.f32.mrb[0].mxu0
    %183 = vmatprep.mubr.f32.mxu0 %v47
    %184 = vmatmul.mubr.f32.gmra.mrb[0].mxu0 %v46
    %v185 = vpop.f32.mrb[0].mxu0
    %v186 = vadd.f32 0.0, %v185
    %v187 = vpop.f32.mrb[0].mxu0
    %188 = vmatprep.mubr.f32.mxu0 %v49
    %189 = vmatmul.mubr.f32.gmra.mrb[0].mxu0 %v48
    %v190 = vpop.f32.mrb[0].mxu0
    %v191 = vadd.f32 0.0, %v190
    %v192 = vpop.f32.mrb[0].mxu0
    %193 = vmatprep.mubr.f32.mxu0 %v51
    %194 = vmatmul.mubr.f32.gmra.mrb[0].mxu0 %v50
    %v195 = vpop.f32.mrb[0].mxu0
    %v196 = vadd.f32 0.0, %v195
    %v197 = vpop.f32.mrb[0].mxu0
    %198 = vmatprep.mubr.f32.mxu0 %v53
    %199 = vmatmul.mubr.f32.gmra.mrb[0].mxu0 %v52
    %v200 = vpop.f32.mrb[0].mxu0
    %v201 = vadd.f32 0.0, %v200
    %v202 = vpop.f32.mrb[0].mxu0
    %203 = vmatprep.mubr.f32.mxu0 %v55
    %204 = vmatmul.mubr.f32.gmra.mrb[0].mxu0 %v54
    %v205 = vpop.f32.mrb[0].mxu0
    %v206 = vadd.f32 0.0, %v205
    %v207 = vpop.f32.mrb[0].mxu0
    %208 = vmatprep.mubr.f32.mxu0 %v57
    %209 = vmatmul.mubr.f32.gmra.mrb[0].mxu0 %v56
    %v210 = vpop.f32.mrb[0].mxu0
    %v211 = vadd.f32 0.0, %v210
    %v212 = vpop.f32.mrb[0].mxu0
    %213 = vmatprep.mubr.f32.mxu0 %v59
    %214 = vmatmul.mubr.f32.gmra.mrb[0].mxu0 %v58
    %v215 = vpop.f32.mrb[0].mxu0
    %v216 = vadd.f32 0.0, %v215
    %v217 = vpop.f32.mrb[0].mxu0
    %218 = vmatprep.mubr.f32.mxu0 %v61
    %219 = vmatmul.mubr.f32.gmra.mrb[0].mxu0 %v60
    %v220 = vpop.f32.mrb[0].mxu0
    %v221 = vadd.f32 0.0, %v220
    %v222 = vpop.f32.mrb[0].mxu0
    %223 = vmatprep.mubr.f32.mxu0 %v63
    %224 = vmatmul.mubr.f32.gmra.mrb[0].mxu0 %v62
    %v225 = vpop.f32.mrb[0].mxu0
    %v226 = vadd.f32 0.0, %v225
    %v227 = vpop.f32.mrb[0].mxu0
    %228 = vmatprep.mubr.f32.mxu0 %v65
    %229 = vmatmul.mubr.f32.gmra.mrb[0].mxu0 %v64
    %v230 = vpop.f32.mrb[0].mxu0
    %v231 = vadd.f32 0.0, %v230
    %v232 = vpop.f32.mrb[0].mxu0
    %233 = vmatprep.mubr.f32.mxu0 %v67
    %234 = vmatmul.mubr.f32.gmra.mrb[0].mxu0 %v66
    %v235 = vpop.f32.mrb[0].mxu0
    %v236 = vadd.f32 0.0, %v235
    %v237 = vpop.f32.mrb[0].mxu0
    %238 = vmatprep.mubr.f32.mxu0 %v69
    %239 = vmatmul.mubr.f32.gmra.mrb[0].mxu0 %v68
    %v240 = vpop.f32.mrb[0].mxu0
    %v241 = vadd.f32 0.0, %v240
    %v242 = vpop.f32.mrb[0].mxu0
    %243 = vmatprep.mubr.f32.mxu0 %v71
    %244 = vmatmul.mubr.f32.gmra.mrb[0].mxu0 %v70
    %v245 = vpop.f32.mrb[0].mxu0
    %v246 = vadd.f32 0.0, %v245
    %v247 = vpop.f32.mrb[0].mxu0
    %248 = vdwg.mxu0
    %v249 = vmax.f32 %v171, 0.0
    %v250 = vmax.f32 %v176, 0.0
    %v251 = vmax.f32 %v181, 0.0
    %v252 = vmax.f32 %v186, 0.0
    %v253 = vmax.f32 %v191, 0.0
    %v254 = vmax.f32 %v196, 0.0
    %v255 = vmax.f32 %v201, 0.0
    %v256 = vmax.f32 %v206, 0.0
    %v257 = vmax.f32 %v211, 0.0
    %v258 = vmax.f32 %v216, 0.0
    %v259 = vmax.f32 %v221, 0.0
    %v260 = vmax.f32 %v226, 0.0
    %v261 = vmax.f32 %v231, 0.0
    %v262 = vmax.f32 %v236, 0.0
    %v263 = vmax.f32 %v241, 0.0
    %v264 = vmax.f32 %v246, 0.0
    %265 = vst [vmem:[#allocation7] sm:$0xff] %v249
    %266 = vst [vmem:[#allocation7 + $0x8] sm:$0xff] %v250
    %267 = vst [vmem:[#allocation7 + $0x10] sm:$0xff] %v251
    %268 = vst [vmem:[#allocation7 + $0x18] sm:$0xff] %v252
    %269 = vst [vmem:[#allocation7 + $0x20] sm:$0xff] %v253
    %270 = vst [vmem:[#allocation7 + $0x28] sm:$0xff] %v254
    %271 = vst [vmem:[#allocation7 + $0x30] sm:$0xff] %v255
    %272 = vst [vmem:[#allocation7 + $0x38] sm:$0xff] %v256
    %273 = vst [vmem:[#allocation7 + $0x40] sm:$0xff] %v257
    %274 = vst [vmem:[#allocation7 + $0x48] sm:$0xff] %v258
    %275 = vst [vmem:[#allocation7 + $0x50] sm:$0xff] %v259
    %276 = vst [vmem:[#allocation7 + $0x58] sm:$0xff] %v260
    %277 = vst [vmem:[#allocation7 + $0x60] sm:$0xff] %v261
    %278 = vst [vmem:[#allocation7 + $0x68] sm:$0xff] %v262
    %279 = vst [vmem:[#allocation7 + $0x70] sm:$0xff] %v263
    %280 = vst [vmem:[#allocation7 + $0x78] sm:$0xff] %v264
    // Predicated region
    $region18: #{tpu_custom_call.1} parent=1 // pred_check
      _
    $region19: #{tpu_custom_call.1} parent=1 // pred_check_branch
      %282 = sbr.rel (0) target = $region21
    $region20: #{tpu_custom_call.1} parent=1 // pred_region
      %s284 = ssub.s32 2048, 2048
      %285 = vsyncadd [#allocation4], %s284
      %s286 = sshll.u32 [#allocation7], 4
      %s287 = int_to_ptr.vmem [resolvable:$true] %s286
      %292 = dma.vmem_to_hbm [thread:$0]  %s287, 2048, %s2, [#allocation4], 128, 128, 8
    $region21: #{tpu_custom_call.1} parent=1 // pred_fallthru
      _
    // Predicated region
    $region22: #{tpu_custom_call.1} parent=1 // pred_check
      _
    $region23: #{tpu_custom_call.1} parent=1 // pred_check_branch
      %294 = sbr.rel (0) target = $region25
    $region24: #{tpu_custom_call.1} parent=1 // pred_region
      %295 = dma.done [#allocation4], 2048
    $region25: #{tpu_custom_call.1} parent=1 // pred_fallthru
      _
    %296 = vsyncpa [#allocation3], 1
    %297 = vsyncpa [#allocation6], 1
    %298 = vsyncpa [#allocation4], 1

</llo_original>
